<compile_context>
chip_gen: v7x
topology: tpu7x:2x2x1
jax: 0.10.0
libtpu: 0.0.40
codegen_flags: <defaults>
</compile_context>

<pallas_src>
import numpy as np
import jax
import jax.numpy as jnp
from jax.experimental import pallas as pl
from jax.experimental.pallas import tpu as pltpu


P = 8  # batch rows folded into the lane dimension (one sublane group)


def _round_up(n, m):
    return ((n + m - 1) // m) * m


def _sigma_kernel(x_ref, w1_ref, b1_ref, w2_ref, b2_ref, mask_ref, o_ref):
    # x   : (TBp, P*in_dim)  bf16     w1 : (P*in_dim, P*H)  bf16
    # b1  : (1, P*H)         f32      w2 : (P*H, P*D*D)     f32
    # b2  : (1, P*D*D)       f32      mask: (1, P*D*D)      f32 (1.0 on diag)
    # o   : (TBp, P*D*D)     f32
    h = jnp.dot(x_ref[...], w1_ref[...], preferred_element_type=jnp.float32)
    h = jnp.maximum(h + b1_ref[...], 0.0)                       # relu(fc1)
    y = jnp.dot(h, w2_ref[...], preferred_element_type=jnp.float32) + b2_ref[...]
    # exp only on diagonal entries (mask is a select; off-diag exp can't leak).
    o_ref[...] = jnp.where(mask_ref[...] != 0.0, jnp.exp(y), y)


def _build_scatter_matrix(D):
    """(T, D*D) one-hot matrix mapping triu-ordered values to a symmetric matrix."""
    T = D * (D + 1) // 2
    rows, cols = np.triu_indices(D)  # same ordering as torch.triu_indices
    M = np.zeros((T, D * D), dtype=np.float32)
    for t, (i, j) in enumerate(zip(rows, cols)):
        M[t, i * D + j] = 1.0
        if i != j:
            M[t, j * D + i] = 1.0
    return M


def sigma_model_forward(s, a, params, tb_rows_max=4096):
    """JAX/Pallas equivalent of SigmaModel.forward(s, a). Returns (B, D, D) f32."""
    w1, b1, w2, b2 = params
    B, D = s.shape
    in_dim, H = w1.shape
    T = D * (D + 1) // 2
    DD = D * D
    assert w2.shape == (H, T)
    assert s.shape[1] + a.shape[1] == in_dim

    # --- offline fusion of the triangular scatter into fc2 (exact, M is 0/1) ---
    M = jnp.asarray(_build_scatter_matrix(D))                 # (T, DD)
    w2f = (w2.astype(jnp.float32) @ M)                        # (H, DD)
    b2f = (b2.astype(jnp.float32) @ M)                        # (DD,)

    # --- block-diagonal "packed" weights: fold P batch rows into lanes ---
    eyeP = jnp.eye(P, dtype=jnp.float32)
    w1_big = jnp.kron(eyeP, w1.astype(jnp.float32)).astype(jnp.bfloat16)  # (P*in, P*H)
    b1_big = jnp.tile(b1.astype(jnp.float32), P)[None, :]                 # (1, P*H)
    w2_big = jnp.kron(eyeP, w2f)                                          # (P*H, P*DD)
    b2_big = jnp.tile(b2f, P)[None, :]                                    # (1, P*DD)

    diag = np.zeros((DD,), np.float32)
    diag[np.arange(D) * D + np.arange(D)] = 1.0
    mask_big = jnp.asarray(np.tile(diag, P))[None, :]                     # (1, P*DD)

    # --- batch tiling (original rows); pad to a whole number of tiles ---
    if B <= tb_rows_max:
        TB = _round_up(B, P)                       # single tile
    else:
        TB = max(64, (tb_rows_max // 64) * 64)     # TB//P multiple of 8 for BlockSpec
    B_pad = _round_up(B, TB)

    x = jnp.concatenate([s, a], axis=1).astype(jnp.float32)   # (B, in_dim)
    if B_pad != B:
        x = jnp.pad(x, ((0, B_pad - B), (0, 0)))
    Bp, TBp = B_pad // P, TB // P

    # Free row-major reshape: (B_pad, in) -> (Bp, P*in); bf16 halves read bytes.
    xp = x.reshape(Bp, P * in_dim).astype(jnp.bfloat16)

    out_packed = pl.pallas_call(
        _sigma_kernel,
        out_shape=jax.ShapeDtypeStruct((Bp, P * DD), jnp.float32),
        grid=(Bp // TBp,),
        in_specs=[
            pl.BlockSpec((TBp, P * in_dim), lambda i: (i, 0)),   # batch-tiled input
            pl.BlockSpec((P * in_dim, P * H), lambda i: (0, 0)), # VMEM-resident weights
            pl.BlockSpec((1, P * H), lambda i: (0, 0)),
            pl.BlockSpec((P * H, P * DD), lambda i: (0, 0)),
            pl.BlockSpec((1, P * DD), lambda i: (0, 0)),
            pl.BlockSpec((1, P * DD), lambda i: (0, 0)),
        ],
        out_specs=pl.BlockSpec((TBp, P * DD), lambda i: (i, 0)),
        compiler_params=pltpu.CompilerParams(
            dimension_semantics=("parallel",)),
    )(xp, w1_big, b1_big, w2_big, b2_big, mask_big)

    # (Bp, P*DD) is the contiguous view of (B_pad, DD): reshape is free.
    return out_packed.reshape(B_pad, DD)[:B].reshape(B, D, D)


def init_params(key, state_dim, action_dim, hidden_dim=64):
    """Deterministic init; weights stored transposed vs. nn.Linear (x @ W)."""
    in_dim = state_dim + action_dim
    tri = state_dim * (state_dim + 1) // 2
    k1, k2, k3, k4 = jax.random.split(key, 4)
    lim1 = 1.0 / np.sqrt(in_dim)
    lim2 = 1.0 / np.sqrt(hidden_dim)
    w1 = jax.random.uniform(k1, (in_dim, hidden_dim), jnp.float32, -lim1, lim1)
    b1 = jax.random.uniform(k2, (hidden_dim,), jnp.float32, -lim1, lim1)
    w2 = jax.random.uniform(k3, (hidden_dim, tri), jnp.float32, -lim2, lim2)
    b2 = jax.random.uniform(k4, (tri,), jnp.float32, -lim2, lim2)
    return w1, b1, w2, b2


def _reference(s, a, params, D):
    """Pure-JAX f32 replica of SigmaModel.forward for correctness checking."""
    w1, b1, w2, b2 = params
    x = jnp.concatenate([s, a], axis=1)
    h = jax.nn.relu(x @ w1 + b1)
    y = h @ w2 + b2
    B = s.shape[0]
    rows, cols = np.triu_indices(D)
    sig = jnp.zeros((B, D, D), jnp.float32).at[:, rows, cols].set(y)
    sig = sig + jnp.swapaxes(sig, 1, 2) - jnp.einsum("bii,ij->bij", sig, jnp.eye(D))
    di = jnp.arange(D)
    sig = sig.at[:, di, di].set(jnp.exp(sig[:, di, di]))
    return sig


if __name__ == "__main__":
    state_dim, action_dim, hidden_dim = 4, 3, 32

    key = jax.random.PRNGKey(0)
    kp, ks, ka = jax.random.split(key, 3)
    params = init_params(kp, state_dim, action_dim, hidden_dim)

    # Small case (single tile, padded batch 2 -> 8).
    batch = 2
    s = jax.random.normal(ks, (batch, state_dim), jnp.float32)
    a = jax.random.normal(ka, (batch, action_dim), jnp.float32)
    sigma = sigma_model_forward(s, a, params)
    jax.block_until_ready(sigma)
    ref = _reference(s, a, params, state_dim)
    # bf16 input/W1 cast -> tolerance loosened vs. the pure-f32 path.
    np.testing.assert_allclose(np.asarray(sigma), np.asarray(ref), rtol=2e-2, atol=2e-2)
    assert sigma.shape == (batch, state_dim, state_dim)

    # Multi-tile / ragged-batch path (exercises pipelined "parallel" grid + padding).
    batch2 = 200
    ks2, ka2 = jax.random.split(jax.random.PRNGKey(1), 2)
    s2 = jax.random.normal(ks2, (batch2, state_dim), jnp.float32)
    a2 = jax.random.normal(ka2, (batch2, action_dim), jnp.float32)
    sigma2 = sigma_model_forward(s2, a2, params, tb_rows_max=64)
    jax.block_until_ready(sigma2)
    ref2 = _reference(s2, a2, params, state_dim)
    np.testing.assert_allclose(np.asarray(sigma2), np.asarray(ref2), rtol=2e-2, atol=2e-2)

    print("KERNEL_OK")
</pallas_src>

<mosaic_0001>
module attributes {stable_mosaic.version = 11 : i64} {
  func.func @_sigma_kernel(%arg0: i32, %arg1: memref<1x56xbf16, #tpu.memory_space<vmem>>, %arg2: memref<56x256xbf16, #tpu.memory_space<vmem>>, %arg3: memref<1x256xf32, #tpu.memory_space<vmem>>, %arg4: memref<256x128xf32, #tpu.memory_space<vmem>>, %arg5: memref<1x128xf32, #tpu.memory_space<vmem>>, %arg6: memref<1x128xf32, #tpu.memory_space<vmem>>, %arg7: memref<1x128xf32, #tpu.memory_space<vmem>>) attributes {dimension_semantics = [#tpu.dimension_semantics<parallel>], iteration_bounds = array<i64: 1>, scalar_prefetch = 0 : i64, scratch_operands = 0 : i64, tpu.core_type = #tpu.core_type<tc>, window_params = [{transform_indices = @transform_0, window_bounds = array<i64: 1, 56>}, {pipeline_mode = #tpu.pipeline_mode<synchronous>, transform_indices = @transform_1, window_bounds = array<i64: 56, 256>}, {pipeline_mode = #tpu.pipeline_mode<synchronous>, transform_indices = @transform_2, window_bounds = array<i64: 1, 256>}, {pipeline_mode = #tpu.pipeline_mode<synchronous>, transform_indices = @transform_3, window_bounds = array<i64: 256, 128>}, {pipeline_mode = #tpu.pipeline_mode<synchronous>, transform_indices = @transform_4, window_bounds = array<i64: 1, 128>}, {pipeline_mode = #tpu.pipeline_mode<synchronous>, transform_indices = @transform_5, window_bounds = array<i64: 1, 128>}, {transform_indices = @transform_6, window_bounds = array<i64: 1, 128>}]} {
    %c0 = arith.constant 0 : index
    %c0_0 = arith.constant 0 : index
    %0 = vector.load %arg1[%c0, %c0_0] : memref<1x56xbf16, #tpu.memory_space<vmem>>, vector<1x56xbf16>
    %c0_1 = arith.constant 0 : index
    %c0_2 = arith.constant 0 : index
    %1 = vector.load %arg2[%c0_1, %c0_2] : memref<56x256xbf16, #tpu.memory_space<vmem>>, vector<56x256xbf16>
    %cst = arith.constant dense<0.000000e+00> : vector<1x256xf32>
    %2 = tpu.matmul %0, %1, %cst {dimension_numbers = #tpu.dot_dimension_numbers<[1], [0], [0], [1], [0, 0, 1, 1], [], []>} : vector<1x56xbf16>, vector<56x256xbf16>, vector<1x256xf32> -> vector<1x256xf32>
    %c0_3 = arith.constant 0 : index
    %c0_4 = arith.constant 0 : index
    %3 = vector.load %arg3[%c0_3, %c0_4] : memref<1x256xf32, #tpu.memory_space<vmem>>, vector<1x256xf32>
    %4 = arith.addf %2, %3 : vector<1x256xf32>
    %cst_5 = arith.constant 0.000000e+00 : f32
    %5 = vector.broadcast %cst_5 : f32 to vector<1x256xf32>
    %6 = arith.maximumf %4, %5 : vector<1x256xf32>
    %c0_6 = arith.constant 0 : index
    %c0_7 = arith.constant 0 : index
    %7 = vector.load %arg4[%c0_6, %c0_7] : memref<256x128xf32, #tpu.memory_space<vmem>>, vector<256x128xf32>
    %cst_8 = arith.constant dense<0.000000e+00> : vector<1x128xf32>
    %8 = tpu.matmul %6, %7, %cst_8 {dimension_numbers = #tpu.dot_dimension_numbers<[1], [0], [0], [1], [0, 0, 1, 1], [], []>} : vector<1x256xf32>, vector<256x128xf32>, vector<1x128xf32> -> vector<1x128xf32>
    %c0_9 = arith.constant 0 : index
    %c0_10 = arith.constant 0 : index
    %9 = vector.load %arg5[%c0_9, %c0_10] : memref<1x128xf32, #tpu.memory_space<vmem>>, vector<1x128xf32>
    %10 = arith.addf %8, %9 : vector<1x128xf32>
    %c0_11 = arith.constant 0 : index
    %c0_12 = arith.constant 0 : index
    %11 = vector.load %arg6[%c0_11, %c0_12] : memref<1x128xf32, #tpu.memory_space<vmem>>, vector<1x128xf32>
    %cst_13 = arith.constant 0.000000e+00 : f32
    %12 = vector.broadcast %cst_13 : f32 to vector<1x128xf32>
    %13 = arith.cmpf one, %11, %12 : vector<1x128xf32>
    %14 = math.exp %10 : vector<1x128xf32>
    %15 = arith.select %13, %14, %10 : vector<1x128xi1>, vector<1x128xf32>
    %c0_14 = arith.constant 0 : index
    %c0_15 = arith.constant 0 : index
    %16 = vector.load %arg7[%c0_14, %c0_15] : memref<1x128xf32, #tpu.memory_space<vmem>>, vector<1x128xf32>
    tpu.vector_store %arg7[%c0_14, %c0_15], %15 {strides = array<i32>} : memref<1x128xf32, #tpu.memory_space<vmem>>, vector<1x128xf32>,
    return
  }
  func.func @transform_0(%arg0: i32) -> (i32, i32) {
    %c0_i32 = arith.constant 0 : i32
    %c0_i32_0 = arith.constant 0 : i32
    return %arg0, %c0_i32 : i32, i32
  }
  func.func @transform_1(%arg0: i32) -> (i32, i32) {
    %c0_i32 = arith.constant 0 : i32
    %c0_i32_0 = arith.constant 0 : i32
    %c0_i32_1 = arith.constant 0 : i32
    return %c0_i32, %c0_i32_0 : i32, i32
  }
  func.func @transform_2(%arg0: i32) -> (i32, i32) {
    %c0_i32 = arith.constant 0 : i32
    %c0_i32_0 = arith.constant 0 : i32
    %c0_i32_1 = arith.constant 0 : i32
    return %c0_i32, %c0_i32_0 : i32, i32
  }
  func.func @transform_3(%arg0: i32) -> (i32, i32) {
    %c0_i32 = arith.constant 0 : i32
    %c0_i32_0 = arith.constant 0 : i32
    %c0_i32_1 = arith.constant 0 : i32
    return %c0_i32, %c0_i32_0 : i32, i32
  }
  func.func @transform_4(%arg0: i32) -> (i32, i32) {
    %c0_i32 = arith.constant 0 : i32
    %c0_i32_0 = arith.constant 0 : i32
    %c0_i32_1 = arith.constant 0 : i32
    return %c0_i32, %c0_i32_0 : i32, i32
  }
  func.func @transform_5(%arg0: i32) -> (i32, i32) {
    %c0_i32 = arith.constant 0 : i32
    %c0_i32_0 = arith.constant 0 : i32
    %c0_i32_1 = arith.constant 0 : i32
    return %c0_i32, %c0_i32_0 : i32, i32
  }
  func.func @transform_6(%arg0: i32) -> (i32, i32) {
    %c0_i32 = arith.constant 0 : i32
    %c0_i32_0 = arith.constant 0 : i32
    return %arg0, %c0_i32 : i32, i32
  }
}

</mosaic_0001>

<llo_original>
// kernel: tpu_custom_call.1
$region0: #{tpu_custom_call.1}
  #allocation0 [shape = 'u32[]', space=smem, size = 0x4, offset = 0x4, fixed_abs, tag = 'smem constant byte address 0x4 - core index']
  #allocation1 [shape = 'u32[144,128]{1,0:T(1,128)}', space=vmem, size = 0x12000, scoped, tag = 'internal scratch']
  %s0 = inlined_call_operand.hbm [shape: bf16[1,56], index: 0, kind: input, shape index: {}]
  %s1 = inlined_call_operand.hbm [shape: bf16[56,256], index: 1, kind: input, shape index: {}]
  %s2 = inlined_call_operand.vmem [shape: f32[1,256], index: 2, kind: input, shape index: {}]
  %s3 = inlined_call_operand.hbm [shape: f32[256,128], index: 3, kind: input, shape index: {}]
  %s4 = inlined_call_operand.vmem [shape: f32[1,128], index: 4, kind: input, shape index: {}]
  %s5 = inlined_call_operand.vmem [shape: f32[1,128], index: 5, kind: input, shape index: {}]
  %s6 = inlined_call_operand.hbm [shape: f32[1,128], index: 6, kind: output, shape index: {}]
  %s7 = sld [smem:[#allocation0]]
  $region46: #{tpu_custom_call.1} parent=0
    _
  %s9 = ssub.s32 1, %s7
  %s10 = scalar_select 0, %s9, %s7
  $region1: #{tpu_custom_call.1} parent=0
    #allocation2 [shape = 'u8[512]{0}', space=vmem, size = 0x400, scoped, tag = 'input window, operand 0, single buffered']
    #allocation3 [shape = 's32[1]{0}', space=sflag, size = 0x4, scoped, tag = 'scoped memory for tpu_custom_call.1']
    #allocation4 [shape = 's32[1]{0}', space=sflag, size = 0x4, scoped, tag = 'scoped memory for tpu_custom_call.1']
    #allocation5 [shape = 'u8[28672]{0}', space=vmem, size = 0x7000, scoped, tag = 'input window, operand 1, single buffered']
    #allocation6 [shape = 's32[1]{0}', space=sflag, size = 0x4, scoped, tag = 'scoped memory for tpu_custom_call.1']
    #allocation7 [shape = 'u8[131072]{0}', space=vmem, size = 0x20000, scoped, tag = 'input window, operand 3, single buffered']
    #allocation8 [shape = 'u8[512]{0}', space=vmem, size = 0x400, scoped, tag = 'output window, operand 0, single buffered']
    %11 = vsyncpa [#allocation3], 0
    %12 = vsyncpa [#allocation6], 0
    %13 = vsyncpa [#allocation4], 0
    // Predicated region
    $region2: #{tpu_custom_call.1} parent=1 // pred_check
      _
    $region3: #{tpu_custom_call.1} parent=1 // pred_check_branch
      %15 = sbr.rel (0) target = $region5
    $region4: #{tpu_custom_call.1} parent=1 // pred_region
      %s17 = ssub.s32 16, 16
      %18 = vsyncadd [#allocation3], %s17
      %s20 = sshll.u32 [#allocation2], 4
      %s21 = int_to_ptr.vmem [resolvable:$true] %s20
      %23 = dma.hbm_to_vmem [thread:$0]  %s0, 16, %s21, [#allocation3]
    $region5: #{tpu_custom_call.1} parent=1 // pred_fallthru
      _
    // Predicated region
    $region6: #{tpu_custom_call.1} parent=1 // pred_check
      _
    $region7: #{tpu_custom_call.1} parent=1 // pred_check_branch
      %25 = sbr.rel (0) target = $region9
    $region8: #{tpu_custom_call.1} parent=1 // pred_region
      %s27 = ssub.s32 896, 896
      %28 = vsyncadd [#allocation6], %s27
      %s29 = sshll.u32 [#allocation5], 4
      %s30 = int_to_ptr.vmem [resolvable:$true] %s29
      %35 = dma.hbm_to_vmem [thread:$0]  %s1, 896, %s30, [#allocation6], 128, 128, 8
    $region9: #{tpu_custom_call.1} parent=1 // pred_fallthru
      _
    // Predicated region
    $region10: #{tpu_custom_call.1} parent=1 // pred_check
      _
    $region11: #{tpu_custom_call.1} parent=1 // pred_check_branch
      %37 = sbr.rel (0) target = $region13
    $region12: #{tpu_custom_call.1} parent=1 // pred_region
      _
    $region13: #{tpu_custom_call.1} parent=1 // pred_fallthru
      _
    // Predicated region
    $region14: #{tpu_custom_call.1} parent=1 // pred_check
      _
    $region15: #{tpu_custom_call.1} parent=1 // pred_check_branch
      %39 = sbr.rel (0) target = $region17
    $region16: #{tpu_custom_call.1} parent=1 // pred_region
      %s41 = ssub.s32 4096, 4096
      %42 = vsyncadd [#allocation6], %s41
      %s43 = sshll.u32 [#allocation7], 4
      %s44 = int_to_ptr.vmem [resolvable:$true] %s43
      %49 = dma.hbm_to_vmem [thread:$0]  %s3, 4096, %s44, [#allocation6], 128, 128, 8
    $region17: #{tpu_custom_call.1} parent=1 // pred_fallthru
      _
    // Predicated region
    $region18: #{tpu_custom_call.1} parent=1 // pred_check
      _
    $region19: #{tpu_custom_call.1} parent=1 // pred_check_branch
      %51 = sbr.rel (0) target = $region21
    $region20: #{tpu_custom_call.1} parent=1 // pred_region
      _
    $region21: #{tpu_custom_call.1} parent=1 // pred_fallthru
      _
    // Predicated region
    $region22: #{tpu_custom_call.1} parent=1 // pred_check
      _
    $region23: #{tpu_custom_call.1} parent=1 // pred_check_branch
      %53 = sbr.rel (0) target = $region25
    $region24: #{tpu_custom_call.1} parent=1 // pred_region
      _
    $region25: #{tpu_custom_call.1} parent=1 // pred_fallthru
      _
    // Predicated region
    $region26: #{tpu_custom_call.1} parent=1 // pred_check
      _
    $region27: #{tpu_custom_call.1} parent=1 // pred_check_branch
      %55 = sbr.rel (0) target = $region29
    $region28: #{tpu_custom_call.1} parent=1 // pred_region
      %56 = dma.done [#allocation3], 16
    $region29: #{tpu_custom_call.1} parent=1 // pred_fallthru
      _
    // Predicated region
    $region30: #{tpu_custom_call.1} parent=1 // pred_check
      _
    $region31: #{tpu_custom_call.1} parent=1 // pred_check_branch
      %58 = sbr.rel (0) target = $region33
    $region32: #{tpu_custom_call.1} parent=1 // pred_region
      %59 = dma.done [#allocation6], 896
    $region33: #{tpu_custom_call.1} parent=1 // pred_fallthru
      _
    // Predicated region
    $region34: #{tpu_custom_call.1} parent=1 // pred_check
      _
    $region35: #{tpu_custom_call.1} parent=1 // pred_check_branch
      %61 = sbr.rel (0) target = $region37
    $region36: #{tpu_custom_call.1} parent=1 // pred_region
      %62 = dma.done [#allocation6], 4096
    $region37: #{tpu_custom_call.1} parent=1 // pred_fallthru
      _
    %v64 = vld [vmem:[#allocation2] sm:$0x1]
    %v65 = vld [vmem:[#allocation5] sm:$0xff]
    %v66 = vld [vmem:[#allocation5 + $0x8] sm:$0xff]
    %v67 = vld [vmem:[#allocation5 + $0x10] sm:$0xff]
    %v68 = vld [vmem:[#allocation5 + $0x18] sm:$0xff]
    %v69 = vld [vmem:[#allocation5 + $0x20] sm:$0xff]
    %v70 = vld [vmem:[#allocation5 + $0x28] sm:$0xff]
    %v71 = vld [vmem:[#allocation5 + $0x30] sm:$0xff]
    %v72 = vld [vmem:[%s2] sm:$0x3]
    %v80 = vunpack.c.l.b16 %v65
    %v81 = vunpack.c.h.b16 %v65
    %v82 = vunpack.c.l.b16 %v66
    %v83 = vunpack.c.h.b16 %v66
    %v84 = vunpack.c.l.b16 %v67
    %v85 = vunpack.c.h.b16 %v67
    %v86 = vunpack.c.l.b16 %v68
    %v87 = vunpack.c.h.b16 %v68
    %v88 = vunpack.c.l.b16 %v69
    %v89 = vunpack.c.h.b16 %v69
    %v90 = vunpack.c.l.b16 %v70
    %v91 = vunpack.c.h.b16 %v70
    %v92 = vunpack.c.l.b16 %v71
    %v93 = vunpack.c.h.b16 %v71
    %v94 = vpack.c.b16 %v82, %v80
    %v95 = vpack.c.b16 %v83, %v81
    %v96 = vpack.c.b16 %v86, %v84
    %v97 = vpack.c.b16 %v87, %v85
    %v98 = vpack.c.b16 %v90, %v88
    %v99 = vpack.c.b16 %v91, %v89
    %v100 = vpack.c.b16 %v92, %v92
    %v101 = vpack.c.b16 %v93, %v93
    %v109 = vlaneseq
    %v110 = vshrl.u32 %v109, 7
    %v111 = vsub.s32 0, %v110
    %v112 = vrot.slane %v72, %v111
    %v113 = vlaneseq
    %v114 = vshrl.u32 %v113, 7
    %v115 = vsub.s32 1, %v114
    %v116 = vrot.slane %v72, %v115
    %vm119 = vcmask 457728
    %v121 = vsel %vm119, %v64, 0
    %vm123 = vcmask 1043456
    %v125 = vsel %vm123, %v100, 0
    %v128 = vsel %vm123, %v101, 0
    %130 = vmatprep.subr.bf16.mxu0 %v95
    %131 = vmatpush1.bf16.msra.mxu0 %v94
    %132 = vmatprep.subr.bf16.mxu0 %v97
    %133 = vmatpush1.bf16.msra.mxu0 %v96
    %134 = vmatprep.subr.bf16.mxu0 %v99
    %135 = vmatpush1.bf16.msra.mxu0 %v98
    %136 = vmatprep.subr.bf16.mxu0 %v128
    %137 = vmatpush1.bf16.msra.mxu0 %v125
    %138 = vmatprep.subr.bf16.mxu0 0
    %139 = vmatpush1.bf16.msra.mxu0 0
    %140 = vmatprep.subr.bf16.mxu0 0
    %141 = vmatpush1.bf16.msra.mxu0 0
    %142 = vmatprep.subr.bf16.mxu0 0
    %143 = vmatpush1.bf16.msra.mxu0 0
    %144 = vmatprep.subr.bf16.mxu0 0
    %145 = vmatpush1.bf16.msra.mxu0 0
    %146 = vmatprep.subr.bf16.mxu0 0
    %147 = vmatpush1.bf16.msra.mxu0 0
    %148 = vmatprep.subr.bf16.mxu0 0
    %149 = vmatpush1.bf16.msra.mxu0 0
    %150 = vmatprep.subr.bf16.mxu0 0
    %151 = vmatpush1.bf16.msra.mxu0 0
    %152 = vmatprep.subr.bf16.mxu0 0
    %153 = vmatpush1.bf16.msra.mxu0 0
    %154 = vmatprep.subr.bf16.mxu0 0
    %155 = vmatpush1.bf16.msra.mxu0 0
    %156 = vmatprep.subr.bf16.mxu0 0
    %157 = vmatpush1.bf16.msra.mxu0 0
    %158 = vmatprep.subr.bf16.mxu0 0
    %159 = vmatpush1.bf16.msra.mxu0 0
    %160 = vmatprep.subr.bf16.mxu0 0
    %161 = vmatpush1.bf16.msra.mxu0 0
    %162 = vmatprep.mubr.bf16.mxu0 0
    %163 = vmatmul.mubr.bf16.gmra.mrb[0].mxu0 %v121
    %v164 = vpop.f32.mrb[0].mxu0
    %v165 = vadd.f32 %v112, %v164
    %v166 = vpop.f32.mrb[0].mxu0
    %v167 = vadd.f32 %v116, %v166
    %v168 = vpop.f32.mrb[0].mxu0
    %v169 = vpop.f32.mrb[0].mxu0
    %170 = vdwg.mxu0
    %v171 = vmax.f32 %v165, 0.0
    %v172 = vmax.f32 %v167, 0.0
    %v173 = vld [vmem:[#allocation7] sm:$0xff]
    %v174 = vld [vmem:[#allocation7 + $0x8] sm:$0xff]
    %v175 = vld [vmem:[#allocation7 + $0x10] sm:$0xff]
    %v176 = vld [vmem:[#allocation7 + $0x18] sm:$0xff]
    %v177 = vld [vmem:[#allocation7 + $0x20] sm:$0xff]
    %v178 = vld [vmem:[#allocation7 + $0x28] sm:$0xff]
    %v179 = vld [vmem:[#allocation7 + $0x30] sm:$0xff]
    %v180 = vld [vmem:[#allocation7 + $0x38] sm:$0xff]
    %v181 = vld [vmem:[#allocation7 + $0x40] sm:$0xff]
    %v182 = vld [vmem:[#allocation7 + $0x48] sm:$0xff]
    %v183 = vld [vmem:[#allocation7 + $0x50] sm:$0xff]
    %v184 = vld [vmem:[#allocation7 + $0x58] sm:$0xff]
    %v185 = vld [vmem:[#allocation7 + $0x60] sm:$0xff]
    %v186 = vld [vmem:[#allocation7 + $0x68] sm:$0xff]
    %v187 = vld [vmem:[#allocation7 + $0x70] sm:$0xff]
    %v188 = vld [vmem:[#allocation7 + $0x78] sm:$0xff]
    %v189 = vld [vmem:[#allocation7 + $0x80] sm:$0xff]
    %v190 = vld [vmem:[#allocation7 + $0x88] sm:$0xff]
    %v191 = vld [vmem:[#allocation7 + $0x90] sm:$0xff]
    %v192 = vld [vmem:[#allocation7 + $0x98] sm:$0xff]
    %v193 = vld [vmem:[#allocation7 + $0xa0] sm:$0xff]
    %v194 = vld [vmem:[#allocation7 + $0xa8] sm:$0xff]
    %v195 = vld [vmem:[#allocation7 + $0xb0] sm:$0xff]
    %v196 = vld [vmem:[#allocation7 + $0xb8] sm:$0xff]
    %v197 = vld [vmem:[#allocation7 + $0xc0] sm:$0xff]
    %v198 = vld [vmem:[#allocation7 + $0xc8] sm:$0xff]
    %v199 = vld [vmem:[#allocation7 + $0xd0] sm:$0xff]
    %v200 = vld [vmem:[#allocation7 + $0xd8] sm:$0xff]
    %v201 = vld [vmem:[#allocation7 + $0xe0] sm:$0xff]
    %v202 = vld [vmem:[#allocation7 + $0xe8] sm:$0xff]
    %v203 = vld [vmem:[#allocation7 + $0xf0] sm:$0xff]
    %v204 = vld [vmem:[#allocation7 + $0xf8] sm:$0xff]
    %v205 = vld [vmem:[%s4] sm:$0x1]
    %206 = vmatprep.subr.mxu0 0.0
    %207 = vmatpush1.msra.mxu0 %v173
    %208 = vmatprep.subr.mxu0 0.0
    %209 = vmatpush1.msra.mxu0 %v174
    %210 = vmatprep.subr.mxu0 0.0
    %211 = vmatpush1.msra.mxu0 %v175
    %212 = vmatprep.subr.mxu0 0.0
    %213 = vmatpush1.msra.mxu0 %v176
    %214 = vmatprep.subr.mxu0 0.0
    %215 = vmatpush1.msra.mxu0 %v177
    %216 = vmatprep.subr.mxu0 0.0
    %217 = vmatpush1.msra.mxu0 %v178
    %218 = vmatprep.subr.mxu0 0.0
    %219 = vmatpush1.msra.mxu0 %v179
    %220 = vmatprep.subr.mxu0 0.0
    %221 = vmatpush1.msra.mxu0 %v180
    %222 = vmatprep.subr.mxu0 0.0
    %223 = vmatpush1.msra.mxu0 %v181
    %224 = vmatprep.subr.mxu0 0.0
    %225 = vmatpush1.msra.mxu0 %v182
    %226 = vmatprep.subr.mxu0 0.0
    %227 = vmatpush1.msra.mxu0 %v183
    %228 = vmatprep.subr.mxu0 0.0
    %229 = vmatpush1.msra.mxu0 %v184
    %230 = vmatprep.subr.mxu0 0.0
    %231 = vmatpush1.msra.mxu0 %v185
    %232 = vmatprep.subr.mxu0 0.0
    %233 = vmatpush1.msra.mxu0 %v186
    %234 = vmatprep.subr.mxu0 0.0
    %235 = vmatpush1.msra.mxu0 %v187
    %236 = vmatprep.subr.mxu0 0.0
    %237 = vmatpush1.msra.mxu0 %v188
    %238 = vmatprep.subr.mxu0 0.0
    %239 = vmatpush1.msra.mxu0 %v189
    %240 = vmatprep.subr.mxu0 0.0
    %241 = vmatpush1.msra.mxu0 %v190
    %242 = vmatprep.subr.mxu0 0.0
    %243 = vmatpush1.msra.mxu0 %v191
    %244 = vmatprep.subr.mxu0 0.0
    %245 = vmatpush1.msra.mxu0 %v192
    %246 = vmatprep.subr.mxu0 0.0
    %247 = vmatpush1.msra.mxu0 %v193
    %248 = vmatprep.subr.mxu0 0.0
    %249 = vmatpush1.msra.mxu0 %v194
    %250 = vmatprep.subr.mxu0 0.0
    %251 = vmatpush1.msra.mxu0 %v195
    %252 = vmatprep.subr.mxu0 0.0
    %253 = vmatpush1.msra.mxu0 %v196
    %254 = vmatprep.subr.mxu0 0.0
    %255 = vmatpush1.msra.mxu0 %v197
    %256 = vmatprep.subr.mxu0 0.0
    %257 = vmatpush1.msra.mxu0 %v198
    %258 = vmatprep.subr.mxu0 0.0
    %259 = vmatpush1.msra.mxu0 %v199
    %260 = vmatprep.subr.mxu0 0.0
    %261 = vmatpush1.msra.mxu0 %v200
    %262 = vmatprep.subr.mxu0 0.0
    %263 = vmatpush1.msra.mxu0 %v201
    %264 = vmatprep.subr.mxu0 0.0
    %265 = vmatpush1.msra.mxu0 %v202
    %266 = vmatprep.subr.mxu0 0.0
    %267 = vmatpush1.msra.mxu0 %v203
    %268 = vmatprep.subr.mxu0 0.0
    %269 = vmatpush1.msra.mxu0 %v204
    %270 = vmatprep.mubr.f32.mxu0 %v172
    %271 = vmatmul.mubr.f32.gmra.mrb[0].mxu0 %v171
    %v272 = vpop.f32.mrb[0].mxu0
    %v273 = vadd.f32 %v205, %v272
    %v274 = vpop.f32.mrb[0].mxu0
    %275 = vdwg.mxu0
    %v276 = vld [vmem:[%s5] sm:$0x1]
    %vm277 = vcmp.ne.f32.partialorder %v276, 0.0
    %v278 = vmul.f32 %v273, 1.442695
    %v279 = vpow.pop %v278
    %v280 = vsel %vm277, %v279, %v273
    %281 = vst [vmem:[#allocation8] sm:$0x1] %v280
    // Predicated region
    $region38: #{tpu_custom_call.1} parent=1 // pred_check
      _
    $region39: #{tpu_custom_call.1} parent=1 // pred_check_branch
      %283 = sbr.rel (0) target = $region41
    $region40: #{tpu_custom_call.1} parent=1 // pred_region
      %s285 = ssub.s32 16, 16
      %286 = vsyncadd [#allocation4], %s285
      %s288 = sshll.u32 [#allocation8], 4
      %s289 = int_to_ptr.vmem [resolvable:$true] %s288
      %291 = dma.vmem_to_hbm [thread:$0]  %s289, 16, %s6, [#allocation4]
    $region41: #{tpu_custom_call.1} parent=1 // pred_fallthru
      _
    // Predicated region
    $region42: #{tpu_custom_call.1} parent=1 // pred_check
      _
    $region43: #{tpu_custom_call.1} parent=1 // pred_check_branch
      %293 = sbr.rel (0) target = $region45
    $region44: #{tpu_custom_call.1} parent=1 // pred_region
      %294 = dma.done [#allocation4], 16
    $region45: #{tpu_custom_call.1} parent=1 // pred_fallthru
      _
    %295 = vsyncpa [#allocation3], 1
    %296 = vsyncpa [#allocation6], 1
    %297 = vsyncpa [#allocation4], 1

</llo_original>
